<compile_context>
chip_gen: v6e
topology: v6e:2x2x1
jax: 0.10.0
libtpu: 0.0.40
codegen_flags: <defaults>
</compile_context>

<pallas_src>
import jax
import jax.numpy as jnp
import numpy as np
from jax import lax
from jax.experimental import pallas as pl
from jax.experimental.pallas import tpu as pltpu

EPS = 1e-5  # PyTorch InstanceNorm2d default eps (affine=False, no running stats)


# ---------------------------------------------------------------------------
# Fused Pallas kernel (one image per grid step)
# ---------------------------------------------------------------------------
def _make_kernel(Cp, H, W, compute_dtype):
    Hp, Wp = H + 2, W + 2
    L = H * Wp            # conv-output length (row stride Wp; cols >= W are don't-care)
    Np = Hp * Wp + 2      # flattened padded image + 2 slack lanes so all 9 tap slices fit
    inv_n = 1.0 / float(H * W)
    taps_off = [(t // 3) * Wp + (t % 3) for t in range(9)]
    # Chunk the conv-output lanes so the stacked-taps temporary stays ~<= 1 MB-ish
    # and the MXU N dimension is a sane ~<= 1024 lanes per matmul.
    rows_per_chunk = max(1, min(H, 1024 // Wp))

    def kernel(x_ref, w1_ref, w2_ref, col_ref, o_ref, hp_ref):
        col = col_ref[...]           # (1, L) int32: output column index (pos % Wp)
        sm = col < W                 # valid output columns (InstanceNorm statistics)
        mW = col == W                # don't-care lane 0 of each output row
        mW1 = col == W + 1           # don't-care lane 1 of each output row

        def conv3x3(src_ref, w_ref):
            # 3x3 conv over the flattened reflection-padded image (row stride Wp),
            # computed as stacked-K MXU matmuls: per L-chunk, gather the 9 lane-shifted
            # taps into (9*Cp, chunk) and do ONE matmul with K = 9*Cp.  Source and
            # weights are already compute_dtype (casts hoisted to the wrapper / the
            # single h store), so there is no per-tap cast and no f32 accumulator RMW.
            wmat = w_ref[...]                                      # (Cp, 9*Cp)
            outs = []
            r0 = 0
            while r0 < H:
                rows = min(rows_per_chunk, H - r0)
                c0, ch = r0 * Wp, rows * Wp
                taps = jnp.concatenate(
                    [src_ref[:, c0 + o: c0 + o + ch] for o in taps_off], axis=0)
                outs.append(jnp.dot(wmat, taps, preferred_element_type=jnp.float32))
                r0 += rows
            return outs[0] if len(outs) == 1 else jnp.concatenate(outs, axis=1)

        def instance_norm(y):
            # One-pass per-channel statistics over the H*W valid positions (all f32).
            yv = jnp.where(sm, y, 0.0)
            s1 = jnp.sum(yv, axis=-1, keepdims=True)
            s2 = jnp.sum(yv * yv, axis=-1, keepdims=True)
            mean = s1 * inv_n
            var = s2 * inv_n - mean * mean
            return (y - mean) * lax.rsqrt(var + EPS)

        # ---- stage 1: conv1 -> InstanceNorm -> ReLU (conv bias cancelled by IN) ----
        h = jnp.maximum(instance_norm(conv3x3(x_ref, w1_ref)), 0.0)     # (Cp, L) f32

        # ---- rebuild the reflection padding of h directly in the VMEM scratch ----
        # When h is placed at lane offset Wp+1, its two don't-care lanes per row land
        # exactly on the right border of that padded row and the left border of the
        # next one.  Fix them on h with a fused select over two lane rolls
        # (col W <- col W-2 of the same row; col W+1 <- col 1 of the next row, i.e.
        # flat index +2), THEN do the row-reflection copies (column fix first!).
        h = jnp.where(mW, jnp.roll(h, 2, axis=1),
                      jnp.where(mW1, jnp.roll(h, -2, axis=1), h))
        # Single cast to compute_dtype: stage-2 taps are sliced from an already-cast copy.
        hp_ref[:, Wp + 1: Wp + 1 + L] = h.astype(compute_dtype)
        # Left border of padded row 1 is the only border lane not covered by h.
        hp_ref[:, Wp: Wp + 1] = hp_ref[:, Wp + 2: Wp + 3]
        # Row reflection: row 0 <- row 2, row Hp-1 <- row Hp-3 (corners come along).
        hp_ref[:, 0:Wp] = hp_ref[:, 2 * Wp: 3 * Wp]
        hp_ref[:, (Hp - 1) * Wp: Hp * Wp] = hp_ref[:, (Hp - 3) * Wp: (Hp - 2) * Wp]
        # Two slack lanes feed only masked-out output columns; keep them finite.
        hp_ref[:, Hp * Wp: Np] = jnp.zeros((Cp, 2), compute_dtype)

        # ---- stage 2: conv2 -> InstanceNorm -> residual add ----
        y2 = instance_norm(conv3x3(hp_ref, w2_ref))
        res = x_ref[:, Wp + 1: Wp + 1 + L].astype(jnp.float32)   # interior of padded x
        o_ref[...] = (res + y2).astype(o_ref.dtype)

    return kernel


# ---------------------------------------------------------------------------
# Wrapper
# ---------------------------------------------------------------------------
def residual_block(x, w1, b1, w2, b2, *, compute_dtype=jnp.bfloat16):
    """x: (B, C, H, W) f32 -> (B, C, H, W) f32 (CycleGAN ResidualBlock forward)."""
    del b1, b2  # conv bias is exactly cancelled by the affine-free InstanceNorm
    B, C, H, W = x.shape
    Hp, Wp = H + 2, W + 2
    L = H * Wp
    Np = Hp * Wp + 2
    itemsize = jnp.dtype(compute_dtype).itemsize
    sub_q = 8 * (4 // itemsize)            # sublane quantum: 8 (f32) / 16 (bf16)
    Cp = ((C + sub_q - 1) // sub_q) * sub_q

    def prep_w(w):
        # (O, I, 3, 3) -> stacked-K layout (Cp, 9*Cp): column block t = di*3+dj holds
        # w[:, :, di, dj]; pre-cast to compute_dtype so there are no in-kernel casts.
        wt = jnp.transpose(w, (0, 2, 3, 1))                         # (O, 3, 3, I)
        wt = jnp.pad(wt, ((0, Cp - C), (0, 0), (0, 0), (0, Cp - C)))
        return wt.reshape(Cp, 9 * Cp).astype(compute_dtype)

    # Reflection-padded input, flattened to row stride Wp, shipped once in compute_dtype.
    xc = jnp.pad(x, ((0, 0), (0, Cp - C), (0, 0), (0, 0))) if Cp != C else x
    xp = jnp.pad(xc, ((0, 0), (0, 0), (1, 1), (1, 1)), mode="reflect")
    x_flat = jnp.pad(xp.reshape(B, Cp, Hp * Wp), ((0, 0), (0, 0), (0, 2)))
    x_flat = x_flat.astype(compute_dtype)                            # (B, Cp, Np)

    # Tiny per-lane output-column index (pos % Wp): drives the IN valid mask and the
    # border-fix selects in-kernel (replaces the old float mask arrays).
    col_idx = (jnp.arange(L, dtype=jnp.int32) % Wp).reshape(1, L)

    kernel = _make_kernel(Cp, H, W, compute_dtype)
    flops = 2 * 2 * 9 * Cp * Cp * H * W * B
    bytes_accessed = (B * Cp * (Np * itemsize + L * 4)
                      + 2 * Cp * 9 * Cp * itemsize + L * 4)

    out_flat = pl.pallas_call(
        kernel,
        out_shape=jax.ShapeDtypeStruct((B, Cp, L), jnp.float32),
        grid=(B,),
        in_specs=[
            pl.BlockSpec((None, Cp, Np), lambda b: (b, 0, 0)),   # padded image (per-image)
            pl.BlockSpec((Cp, 9 * Cp), lambda b: (0, 0)),        # conv1 stacked-K weights
            pl.BlockSpec((Cp, 9 * Cp), lambda b: (0, 0)),        # conv2 stacked-K weights
            pl.BlockSpec((1, L), lambda b: (0, 0)),              # output column index
        ],
        out_specs=pl.BlockSpec((None, Cp, L), lambda b: (b, 0, 0)),
        scratch_shapes=[pltpu.VMEM((Cp, Np), compute_dtype)],    # padded intermediate h
        compiler_params=pltpu.CompilerParams(
            dimension_semantics=("parallel",),
            # Stay below v7x's 64 MiB physical per-core VMEM (Mosaic needs headroom);
            # far above what these shapes require on any generation.
            vmem_limit_bytes=48 * 1024 * 1024,
        ),
        cost_estimate=pl.CostEstimate(
            flops=flops, transcendentals=2 * B * Cp, bytes_accessed=bytes_accessed),
    )(x_flat, prep_w(w1), prep_w(w2), col_idx)

    # NOTE: for chained residual blocks this strip (and the reflect-pad above) could be
    # kept in the padded layout between blocks; done here once for a single block.
    return out_flat.reshape(B, Cp, H, Wp)[:, :C, :, :W]


# ---------------------------------------------------------------------------
# Pure-JAX reference (matches the PyTorch module)
# ---------------------------------------------------------------------------
def _ref_block(x, w1, b1, w2, b2):
    def conv_in(x_, w, b):
        xp = jnp.pad(x_, ((0, 0), (0, 0), (1, 1), (1, 1)), mode="reflect")
        y = lax.conv_general_dilated(
            xp, w, (1, 1), "VALID", dimension_numbers=("NCHW", "OIHW", "NCHW")
        ) + b[None, :, None, None]
        mean = y.mean(axis=(2, 3), keepdims=True)
        var = y.var(axis=(2, 3), keepdims=True)   # biased, like PyTorch InstanceNorm2d
        return (y - mean) / jnp.sqrt(var + EPS)

    h = jnp.maximum(conv_in(x, w1, b1), 0.0)
    return x + conv_in(h, w2, b2)


# ---------------------------------------------------------------------------
if __name__ == "__main__":
    B, C, H, W = 2, 4, 16, 16
    key = jax.random.PRNGKey(0)
    kx, k1, k2, k3, k4 = jax.random.split(key, 5)

    x = jax.random.normal(kx, (B, C, H, W), dtype=jnp.float32)
    w1 = 0.1 * jax.random.normal(k1, (C, C, 3, 3), dtype=jnp.float32)
    b1 = 0.1 * jax.random.normal(k2, (C,), dtype=jnp.float32)
    w2 = 0.1 * jax.random.normal(k3, (C, C, 3, 3), dtype=jnp.float32)
    b2 = 0.1 * jax.random.normal(k4, (C,), dtype=jnp.float32)

    run = jax.jit(residual_block, static_argnames=("compute_dtype",))
    ref = jax.block_until_ready(_ref_block(x, w1, b1, w2, b2))

    # Exact (f32 MXU) path: tight tolerance against the PyTorch-equivalent reference.
    out_f32 = jax.block_until_ready(run(x, w1, b1, w2, b2, compute_dtype=jnp.float32))
    np.testing.assert_allclose(np.asarray(out_f32), np.asarray(ref), rtol=2e-4, atol=2e-4)

    # bf16 path (bf16 operands/residual, f32 accumulation + f32 IN stats): loose tolerance.
    out_bf16 = jax.block_until_ready(run(x, w1, b1, w2, b2, compute_dtype=jnp.bfloat16))
    np.testing.assert_allclose(np.asarray(out_bf16), np.asarray(ref), rtol=5e-2, atol=5e-2)

    print("KERNEL_OK")
</pallas_src>

<mosaic_0001>
module attributes {stable_mosaic.version = 11 : i64} {
  func.func @kernel(%arg0: i32, %arg1: memref<1x8x326xf32, #tpu.memory_space<vmem>>, %arg2: memref<8x72xf32, #tpu.memory_space<vmem>>, %arg3: memref<8x72xf32, #tpu.memory_space<vmem>>, %arg4: memref<1x288xi32, #tpu.memory_space<vmem>>, %arg5: memref<1x8x288xf32, #tpu.memory_space<vmem>>, %arg6: memref<8x326xf32, #tpu.memory_space<vmem>>) attributes {dimension_semantics = [#tpu.dimension_semantics<parallel>], iteration_bounds = array<i64: 2>, scalar_prefetch = 0 : i64, scratch_operands = 1 : i64, tpu.core_type = #tpu.core_type<tc>, window_params = [{transform_indices = @transform_0, window_bounds = array<i64: 1, 8, 326>}, {pipeline_mode = #tpu.pipeline_mode<synchronous>, transform_indices = @transform_1, window_bounds = array<i64: 8, 72>}, {pipeline_mode = #tpu.pipeline_mode<synchronous>, transform_indices = @transform_2, window_bounds = array<i64: 8, 72>}, {pipeline_mode = #tpu.pipeline_mode<synchronous>, transform_indices = @transform_3, window_bounds = array<i64: 1, 288>}, {transform_indices = @transform_4, window_bounds = array<i64: 1, 8, 288>}]} {
    %c0 = arith.constant 0 : index
    %c0_0 = arith.constant 0 : index
    %0 = vector.load %arg4[%c0, %c0_0] : memref<1x288xi32, #tpu.memory_space<vmem>>, vector<1x288xi32>
    %c16_i32 = arith.constant 16 : i32
    %1 = vector.broadcast %c16_i32 : i32 to vector<1x288xi32>
    %2 = arith.cmpi slt, %0, %1 : vector<1x288xi32>
    %c16_i32_1 = arith.constant 16 : i32
    %3 = vector.broadcast %c16_i32_1 : i32 to vector<1x288xi32>
    %4 = arith.cmpi eq, %0, %3 : vector<1x288xi32>
    %c17_i32 = arith.constant 17 : i32
    %5 = vector.broadcast %c17_i32 : i32 to vector<1x288xi32>
    %6 = arith.cmpi eq, %0, %5 : vector<1x288xi32>
    %c0_2 = arith.constant 0 : index
    %c0_3 = arith.constant 0 : index
    %7 = vector.load %arg2[%c0_2, %c0_3] : memref<8x72xf32, #tpu.memory_space<vmem>>, vector<8x72xf32>
    %c0_4 = arith.constant 0 : index
    %c0_5 = arith.constant 0 : index
    %c0_6 = arith.constant 0 : index
    %8 = vector.load %arg1[%c0_4, %c0_5, %c0_6] : memref<1x8x326xf32, #tpu.memory_space<vmem>>, vector<1x8x288xf32>
    %9 = vector.shape_cast %8 : vector<1x8x288xf32> to vector<8x288xf32>
    %c0_7 = arith.constant 0 : index
    %c0_8 = arith.constant 0 : index
    %c1 = arith.constant 1 : index
    %10 = vector.load %arg1[%c0_7, %c0_8, %c1] : memref<1x8x326xf32, #tpu.memory_space<vmem>>, vector<1x8x288xf32>
    %11 = vector.shape_cast %10 : vector<1x8x288xf32> to vector<8x288xf32>
    %c0_9 = arith.constant 0 : index
    %c0_10 = arith.constant 0 : index
    %c2 = arith.constant 2 : index
    %12 = vector.load %arg1[%c0_9, %c0_10, %c2] : memref<1x8x326xf32, #tpu.memory_space<vmem>>, vector<1x8x288xf32>
    %13 = vector.shape_cast %12 : vector<1x8x288xf32> to vector<8x288xf32>
    %c0_11 = arith.constant 0 : index
    %c0_12 = arith.constant 0 : index
    %c18 = arith.constant 18 : index
    %14 = vector.load %arg1[%c0_11, %c0_12, %c18] : memref<1x8x326xf32, #tpu.memory_space<vmem>>, vector<1x8x288xf32>
    %15 = vector.shape_cast %14 : vector<1x8x288xf32> to vector<8x288xf32>
    %c0_13 = arith.constant 0 : index
    %c0_14 = arith.constant 0 : index
    %c19 = arith.constant 19 : index
    %16 = vector.load %arg1[%c0_13, %c0_14, %c19] : memref<1x8x326xf32, #tpu.memory_space<vmem>>, vector<1x8x288xf32>
    %17 = vector.shape_cast %16 : vector<1x8x288xf32> to vector<8x288xf32>
    %c0_15 = arith.constant 0 : index
    %c0_16 = arith.constant 0 : index
    %c20 = arith.constant 20 : index
    %18 = vector.load %arg1[%c0_15, %c0_16, %c20] : memref<1x8x326xf32, #tpu.memory_space<vmem>>, vector<1x8x288xf32>
    %19 = vector.shape_cast %18 : vector<1x8x288xf32> to vector<8x288xf32>
    %c0_17 = arith.constant 0 : index
    %c0_18 = arith.constant 0 : index
    %c36 = arith.constant 36 : index
    %20 = vector.load %arg1[%c0_17, %c0_18, %c36] : memref<1x8x326xf32, #tpu.memory_space<vmem>>, vector<1x8x288xf32>
    %21 = vector.shape_cast %20 : vector<1x8x288xf32> to vector<8x288xf32>
    %c0_19 = arith.constant 0 : index
    %c0_20 = arith.constant 0 : index
    %c37 = arith.constant 37 : index
    %22 = vector.load %arg1[%c0_19, %c0_20, %c37] : memref<1x8x326xf32, #tpu.memory_space<vmem>>, vector<1x8x288xf32>
    %23 = vector.shape_cast %22 : vector<1x8x288xf32> to vector<8x288xf32>
    %c0_21 = arith.constant 0 : index
    %c0_22 = arith.constant 0 : index
    %c38 = arith.constant 38 : index
    %24 = vector.load %arg1[%c0_21, %c0_22, %c38] : memref<1x8x326xf32, #tpu.memory_space<vmem>>, vector<1x8x288xf32>
    %25 = vector.shape_cast %24 : vector<1x8x288xf32> to vector<8x288xf32>
    %26 = tpu.concatenate %9, %11, %13, %15, %17, %19, %21, %23, %25 in 0 : vector<8x288xf32>, vector<8x288xf32>, vector<8x288xf32>, vector<8x288xf32>, vector<8x288xf32>, vector<8x288xf32>, vector<8x288xf32>, vector<8x288xf32>, vector<8x288xf32> -> vector<72x288xf32>
    %cst = arith.constant dense<0.000000e+00> : vector<8x288xf32>
    %27 = tpu.matmul %7, %26, %cst {dimension_numbers = #tpu.dot_dimension_numbers<[1], [0], [0], [1], [0, 0, 1, 1], [], []>} : vector<8x72xf32>, vector<72x288xf32>, vector<8x288xf32> -> vector<8x288xf32>
    %cst_23 = arith.constant 0.000000e+00 : f32
    %28 = vector.shape_cast %2 : vector<1x288xi1> to vector<1x288xi1>
    %29 = vector.broadcast %28 : vector<1x288xi1> to vector<8x288xi1>
    %30 = vector.broadcast %cst_23 : f32 to vector<8x288xf32>
    %31 = arith.select %29, %27, %30 : vector<8x288xi1>, vector<8x288xf32>
    %cst_24 = arith.constant dense<0.000000e+00> : vector<8xf32>
    %32 = vector.multi_reduction <add>, %31, %cst_24 [1] : vector<8x288xf32> to vector<8xf32>
    %33 = vector.shape_cast %32 : vector<8xf32> to vector<8x1xf32>
    %34 = arith.mulf %31, %31 : vector<8x288xf32>
    %cst_25 = arith.constant dense<0.000000e+00> : vector<8xf32>
    %35 = vector.multi_reduction <add>, %34, %cst_25 [1] : vector<8x288xf32> to vector<8xf32>
    %36 = vector.shape_cast %35 : vector<8xf32> to vector<8x1xf32>
    %cst_26 = arith.constant 3.906250e-03 : f32
    %37 = vector.broadcast %cst_26 : f32 to vector<8x1xf32>
    %38 = arith.mulf %33, %37 : vector<8x1xf32>
    %cst_27 = arith.constant 3.906250e-03 : f32
    %39 = vector.broadcast %cst_27 : f32 to vector<8x1xf32>
    %40 = arith.mulf %36, %39 : vector<8x1xf32>
    %41 = arith.mulf %38, %38 : vector<8x1xf32>
    %42 = arith.subf %40, %41 : vector<8x1xf32>
    %43 = vector.broadcast %38 : vector<8x1xf32> to vector<8x288xf32>
    %44 = arith.subf %27, %43 : vector<8x288xf32>
    %cst_28 = arith.constant 9.99999974E-6 : f32
    %45 = vector.broadcast %cst_28 : f32 to vector<8x1xf32>
    %46 = arith.addf %42, %45 : vector<8x1xf32>
    %47 = math.rsqrt %46 : vector<8x1xf32>
    %48 = vector.broadcast %47 : vector<8x1xf32> to vector<8x288xf32>
    %49 = arith.mulf %44, %48 : vector<8x288xf32>
    %cst_29 = arith.constant 0.000000e+00 : f32
    %50 = vector.broadcast %cst_29 : f32 to vector<8x288xf32>
    %51 = arith.maximumf %49, %50 : vector<8x288xf32>
    %52 = vector.extract_strided_slice %51 {offsets = [0, 286], sizes = [8, 2], strides = [1, 1]} : vector<8x288xf32> to vector<8x2xf32>
    %53 = vector.extract_strided_slice %51 {offsets = [0, 0], sizes = [8, 286], strides = [1, 1]} : vector<8x288xf32> to vector<8x286xf32>
    %54 = tpu.concatenate %52, %53 in 1 : vector<8x2xf32>, vector<8x286xf32> -> vector<8x288xf32>
    %55 = vector.extract_strided_slice %51 {offsets = [0, 2], sizes = [8, 286], strides = [1, 1]} : vector<8x288xf32> to vector<8x286xf32>
    %56 = vector.extract_strided_slice %51 {offsets = [0, 0], sizes = [8, 2], strides = [1, 1]} : vector<8x288xf32> to vector<8x2xf32>
    %57 = tpu.concatenate %55, %56 in 1 : vector<8x286xf32>, vector<8x2xf32> -> vector<8x288xf32>
    %58 = vector.shape_cast %6 : vector<1x288xi1> to vector<1x288xi1>
    %59 = vector.broadcast %58 : vector<1x288xi1> to vector<8x288xi1>
    %60 = arith.select %59, %57, %51 : vector<8x288xi1>, vector<8x288xf32>
    %61 = vector.shape_cast %4 : vector<1x288xi1> to vector<1x288xi1>
    %62 = vector.broadcast %61 : vector<1x288xi1> to vector<8x288xi1>
    %63 = arith.select %62, %54, %60 : vector<8x288xi1>, vector<8x288xf32>
    %c0_30 = arith.constant 0 : index
    %c19_31 = arith.constant 19 : index
    %64 = vector.load %arg6[%c0_30, %c19_31] : memref<8x326xf32, #tpu.memory_space<vmem>>, vector<8x288xf32>
    tpu.vector_store %arg6[%c0_30, %c19_31], %63 {strides = array<i32>} : memref<8x326xf32, #tpu.memory_space<vmem>>, vector<8x288xf32>,
    %c0_32 = arith.constant 0 : index
    %c20_33 = arith.constant 20 : index
    %65 = vector.load %arg6[%c0_32, %c20_33] : memref<8x326xf32, #tpu.memory_space<vmem>>, vector<8x1xf32>
    %c0_34 = arith.constant 0 : index
    %c18_35 = arith.constant 18 : index
    %66 = vector.load %arg6[%c0_34, %c18_35] : memref<8x326xf32, #tpu.memory_space<vmem>>, vector<8x1xf32>
    tpu.vector_store %arg6[%c0_34, %c18_35], %65 {strides = array<i32>} : memref<8x326xf32, #tpu.memory_space<vmem>>, vector<8x1xf32>,
    %c0_36 = arith.constant 0 : index
    %c36_37 = arith.constant 36 : index
    %67 = vector.load %arg6[%c0_36, %c36_37] : memref<8x326xf32, #tpu.memory_space<vmem>>, vector<8x18xf32>
    %c0_38 = arith.constant 0 : index
    %c0_39 = arith.constant 0 : index
    %68 = vector.load %arg6[%c0_38, %c0_39] : memref<8x326xf32, #tpu.memory_space<vmem>>, vector<8x18xf32>
    tpu.vector_store %arg6[%c0_38, %c0_39], %67 {strides = array<i32>} : memref<8x326xf32, #tpu.memory_space<vmem>>, vector<8x18xf32>,
    %c0_40 = arith.constant 0 : index
    %c270 = arith.constant 270 : index
    %69 = vector.load %arg6[%c0_40, %c270] : memref<8x326xf32, #tpu.memory_space<vmem>>, vector<8x18xf32>
    %c0_41 = arith.constant 0 : index
    %c306 = arith.constant 306 : index
    %70 = vector.load %arg6[%c0_41, %c306] : memref<8x326xf32, #tpu.memory_space<vmem>>, vector<8x18xf32>
    tpu.vector_store %arg6[%c0_41, %c306], %69 {strides = array<i32>} : memref<8x326xf32, #tpu.memory_space<vmem>>, vector<8x18xf32>,
    %cst_42 = arith.constant 0.000000e+00 : f32
    %71 = vector.broadcast %cst_42 : f32 to vector<8x2xf32>
    %c0_43 = arith.constant 0 : index
    %c324 = arith.constant 324 : index
    %72 = vector.load %arg6[%c0_43, %c324] : memref<8x326xf32, #tpu.memory_space<vmem>>, vector<8x2xf32>
    tpu.vector_store %arg6[%c0_43, %c324], %71 {strides = array<i32>} : memref<8x326xf32, #tpu.memory_space<vmem>>, vector<8x2xf32>,
    %c0_44 = arith.constant 0 : index
    %c0_45 = arith.constant 0 : index
    %73 = vector.load %arg3[%c0_44, %c0_45] : memref<8x72xf32, #tpu.memory_space<vmem>>, vector<8x72xf32>
    %c0_46 = arith.constant 0 : index
    %c0_47 = arith.constant 0 : index
    %74 = vector.load %arg6[%c0_46, %c0_47] : memref<8x326xf32, #tpu.memory_space<vmem>>, vector<8x288xf32>
    %c0_48 = arith.constant 0 : index
    %c1_49 = arith.constant 1 : index
    %75 = vector.load %arg6[%c0_48, %c1_49] : memref<8x326xf32, #tpu.memory_space<vmem>>, vector<8x288xf32>
    %c0_50 = arith.constant 0 : index
    %c2_51 = arith.constant 2 : index
    %76 = vector.load %arg6[%c0_50, %c2_51] : memref<8x326xf32, #tpu.memory_space<vmem>>, vector<8x288xf32>
    %c0_52 = arith.constant 0 : index
    %c18_53 = arith.constant 18 : index
    %77 = vector.load %arg6[%c0_52, %c18_53] : memref<8x326xf32, #tpu.memory_space<vmem>>, vector<8x288xf32>
    %c0_54 = arith.constant 0 : index
    %c19_55 = arith.constant 19 : index
    %78 = vector.load %arg6[%c0_54, %c19_55] : memref<8x326xf32, #tpu.memory_space<vmem>>, vector<8x288xf32>
    %c0_56 = arith.constant 0 : index
    %c20_57 = arith.constant 20 : index
    %79 = vector.load %arg6[%c0_56, %c20_57] : memref<8x326xf32, #tpu.memory_space<vmem>>, vector<8x288xf32>
    %c0_58 = arith.constant 0 : index
    %c36_59 = arith.constant 36 : index
    %80 = vector.load %arg6[%c0_58, %c36_59] : memref<8x326xf32, #tpu.memory_space<vmem>>, vector<8x288xf32>
    %c0_60 = arith.constant 0 : index
    %c37_61 = arith.constant 37 : index
    %81 = vector.load %arg6[%c0_60, %c37_61] : memref<8x326xf32, #tpu.memory_space<vmem>>, vector<8x288xf32>
    %c0_62 = arith.constant 0 : index
    %c38_63 = arith.constant 38 : index
    %82 = vector.load %arg6[%c0_62, %c38_63] : memref<8x326xf32, #tpu.memory_space<vmem>>, vector<8x288xf32>
    %83 = tpu.concatenate %74, %75, %76, %77, %78, %79, %80, %81, %82 in 0 : vector<8x288xf32>, vector<8x288xf32>, vector<8x288xf32>, vector<8x288xf32>, vector<8x288xf32>, vector<8x288xf32>, vector<8x288xf32>, vector<8x288xf32>, vector<8x288xf32> -> vector<72x288xf32>
    %cst_64 = arith.constant dense<0.000000e+00> : vector<8x288xf32>
    %84 = tpu.matmul %73, %83, %cst_64 {dimension_numbers = #tpu.dot_dimension_numbers<[1], [0], [0], [1], [0, 0, 1, 1], [], []>} : vector<8x72xf32>, vector<72x288xf32>, vector<8x288xf32> -> vector<8x288xf32>
    %cst_65 = arith.constant 0.000000e+00 : f32
    %85 = vector.shape_cast %2 : vector<1x288xi1> to vector<1x288xi1>
    %86 = vector.broadcast %85 : vector<1x288xi1> to vector<8x288xi1>
    %87 = vector.broadcast %cst_65 : f32 to vector<8x288xf32>
    %88 = arith.select %86, %84, %87 : vector<8x288xi1>, vector<8x288xf32>
    %cst_66 = arith.constant dense<0.000000e+00> : vector<8xf32>
    %89 = vector.multi_reduction <add>, %88, %cst_66 [1] : vector<8x288xf32> to vector<8xf32>
    %90 = vector.shape_cast %89 : vector<8xf32> to vector<8x1xf32>
    %91 = arith.mulf %88, %88 : vector<8x288xf32>
    %cst_67 = arith.constant dense<0.000000e+00> : vector<8xf32>
    %92 = vector.multi_reduction <add>, %91, %cst_67 [1] : vector<8x288xf32> to vector<8xf32>
    %93 = vector.shape_cast %92 : vector<8xf32> to vector<8x1xf32>
    %cst_68 = arith.constant 3.906250e-03 : f32
    %94 = vector.broadcast %cst_68 : f32 to vector<8x1xf32>
    %95 = arith.mulf %90, %94 : vector<8x1xf32>
    %cst_69 = arith.constant 3.906250e-03 : f32
    %96 = vector.broadcast %cst_69 : f32 to vector<8x1xf32>
    %97 = arith.mulf %93, %96 : vector<8x1xf32>
    %98 = arith.mulf %95, %95 : vector<8x1xf32>
    %99 = arith.subf %97, %98 : vector<8x1xf32>
    %100 = vector.broadcast %95 : vector<8x1xf32> to vector<8x288xf32>
    %101 = arith.subf %84, %100 : vector<8x288xf32>
    %cst_70 = arith.constant 9.99999974E-6 : f32
    %102 = vector.broadcast %cst_70 : f32 to vector<8x1xf32>
    %103 = arith.addf %99, %102 : vector<8x1xf32>
    %104 = math.rsqrt %103 : vector<8x1xf32>
    %105 = vector.broadcast %104 : vector<8x1xf32> to vector<8x288xf32>
    %106 = arith.mulf %101, %105 : vector<8x288xf32>
    %c0_71 = arith.constant 0 : index
    %c0_72 = arith.constant 0 : index
    %c19_73 = arith.constant 19 : index
    %107 = vector.load %arg1[%c0_71, %c0_72, %c19_73] : memref<1x8x326xf32, #tpu.memory_space<vmem>>, vector<1x8x288xf32>
    %108 = vector.shape_cast %107 : vector<1x8x288xf32> to vector<8x288xf32>
    %109 = arith.addf %108, %106 : vector<8x288xf32>
    %c0_74 = arith.constant 0 : index
    %c0_75 = arith.constant 0 : index
    %c0_76 = arith.constant 0 : index
    %110 = vector.load %arg5[%c0_74, %c0_75, %c0_76] : memref<1x8x288xf32, #tpu.memory_space<vmem>>, vector<1x8x288xf32>
    %111 = vector.shape_cast %110 : vector<1x8x288xf32> to vector<8x288xf32>
    %112 = vector.shape_cast %109 : vector<8x288xf32> to vector<1x8x288xf32>
    tpu.vector_store %arg5[%c0_74, %c0_75, %c0_76], %112 {strides = array<i32>} : memref<1x8x288xf32, #tpu.memory_space<vmem>>, vector<1x8x288xf32>,
    return
  }
  func.func @transform_0(%arg0: i32) -> (i32, i32, i32) {
    %c0_i32 = arith.constant 0 : i32
    %c0_i32_0 = arith.constant 0 : i32
    %c0_i32_1 = arith.constant 0 : i32
    return %arg0, %c0_i32, %c0_i32_0 : i32, i32, i32
  }
  func.func @transform_1(%arg0: i32) -> (i32, i32) {
    %c0_i32 = arith.constant 0 : i32
    %c0_i32_0 = arith.constant 0 : i32
    %c0_i32_1 = arith.constant 0 : i32
    return %c0_i32, %c0_i32_0 : i32, i32
  }
  func.func @transform_2(%arg0: i32) -> (i32, i32) {
    %c0_i32 = arith.constant 0 : i32
    %c0_i32_0 = arith.constant 0 : i32
    %c0_i32_1 = arith.constant 0 : i32
    return %c0_i32, %c0_i32_0 : i32, i32
  }
  func.func @transform_3(%arg0: i32) -> (i32, i32) {
    %c0_i32 = arith.constant 0 : i32
    %c0_i32_0 = arith.constant 0 : i32
    %c0_i32_1 = arith.constant 0 : i32
    return %c0_i32, %c0_i32_0 : i32, i32
  }
  func.func @transform_4(%arg0: i32) -> (i32, i32, i32) {
    %c0_i32 = arith.constant 0 : i32
    %c0_i32_0 = arith.constant 0 : i32
    %c0_i32_1 = arith.constant 0 : i32
    return %arg0, %c0_i32, %c0_i32_0 : i32, i32, i32
  }
}

</mosaic_0001>

<llo_original>
// kernel: residual_block.1
$region0: #{residual_block.1}
  #allocation0 [shape = 'u32[]', space=smem, size = 0x4, offset = 0x4, fixed_abs, tag = 'smem constant byte address 0x4 - core index']
  #allocation1 [shape = 'u32[144,128]{1,0:T(1,128)}', space=vmem, size = 0x12000, scoped, tag = 'internal scratch']
  #allocation2 [shape = 'f32[8,326]{1,0:T(8,128)}', space=vmem, size = 0x3000, scoped, tag = 'scratch operand']
  %s0 = inlined_call_operand.vmem [shape: f32[2,8,326], index: 0, kind: input, shape index: {}]
  %s1 = inlined_call_operand.vmem [shape: f32[8,72], index: 1, kind: input, shape index: {}]
  %s2 = inlined_call_operand.vmem [shape: f32[8,72], index: 2, kind: input, shape index: {}]
  %s3 = inlined_call_operand.vmem [shape: s32[1,288], index: 3, kind: input, shape index: {}]
  %s4 = inlined_call_operand.vmem [shape: f32[2,8,288], index: 4, kind: output, shape index: {}]
  %s5 = sld [smem:[#allocation0]]
  $region49: #{residual_block.1} parent=0
    _
  %s7 = ssub.s32 1, %s5
  %s8 = scalar_select 0, %s7, %s5
  loop: start=0, step=1, limit=4
  $region2: #{residual_block.1} parent=0 // loop_pre_header
    _
  $region3: #{residual_block.1} parent=0 // loop_header
    %s10 = sphi 0, %s14
    %p11 = scmp.ge.s32.totalorder %s10, 4
    %s20 = sphi 0, %s22
    %s23 = sphi 0, %s20
    %s24 = sphi 0, %s23
    %s40 = sphi 0, %s24
    %s44 = sphi 0, %s44
    %s46 = sphi 0, %s44
    %s47 = sphi 0, %s46
    %s61 = sphi 0, %s47
    %s65 = sphi 0, %s65
    %s67 = sphi 0, %s65
    %s68 = sphi 0, %s67
    %s82 = sphi 0, %s68
    %s86 = sphi 0, %s86
    %s88 = sphi 0, %s86
    %s89 = sphi 0, %s88
    %s103 = sphi 0, %s89
    %s109 = sphi 0, %s111
    %s112 = sphi 0, %s109
    %s113 = sphi 0, %s112
    %s129 = sphi 0, %s113
  $region4: #{residual_block.1} parent=0 // loop_header_branch
    %13 = sbr.rel (%p11) target = $region8
  $region5: #{residual_block.1} parent=0 // loop_body
    %s15 = ssub.s32 %s10, 1
    %s16 = ssub.s32 %s10, 2
    %s17 = sadd.s32 %s10, 1
    %s18 = ssub.s32 %s10, %s17
    %p19 = scmp.eq.s32.totalorder %s18, 0
    %s21 = sadd.s32 %s20, 1
    %s22 = scalar_select %p19, %s20, %s21
    %p25 = pneg %p19
    %p26 = scmp.eq.s32.totalorder %s10, 1
    %p27 = por %p25, %p26
    %p28 = scmp.ne.s32.totalorder %s20, %s23
    %p29 = scmp.eq.s32.totalorder %s10, 0
    %p30 = por %p28, %p29
    %p31 = scmp.ne.s32.totalorder %s20, %s23
    %p32 = scmp.eq.s32.totalorder %s15, 1
    %p33 = por %p31, %p32
    %p34 = scmp.ne.s32.totalorder %s23, %s24
    %p35 = scmp.eq.s32.totalorder %s15, 0
    %p36 = por %p34, %p35
    %p37 = scmp.ne.s32.totalorder %s23, %s24
    %p38 = scmp.eq.s32.totalorder %s16, 1
    %p39 = por %p37, %p38
    %p41 = scmp.ne.s32.totalorder %s24, %s40
    %p42 = scmp.eq.s32.totalorder %s16, 0
    %p43 = por %p41, %p42
    %s45 = sadd.s32 %s44, 1
    %p48 = scmp.eq.s32.totalorder %s10, 1
    %p49 = scmp.ne.s32.totalorder %s44, %s46
    %p50 = scmp.eq.s32.totalorder %s10, 0
    %p51 = por %p49, %p50
    %p52 = scmp.ne.s32.totalorder %s44, %s46
    %p53 = scmp.eq.s32.totalorder %s15, 1
    %p54 = por %p52, %p53
    %p55 = scmp.ne.s32.totalorder %s46, %s47
    %p56 = scmp.eq.s32.totalorder %s15, 0
    %p57 = por %p55, %p56
    %p58 = scmp.ne.s32.totalorder %s46, %s47
    %p59 = scmp.eq.s32.totalorder %s16, 1
    %p60 = por %p58, %p59
    %p62 = scmp.ne.s32.totalorder %s47, %s61
    %p63 = scmp.eq.s32.totalorder %s16, 0
    %p64 = por %p62, %p63
    %s66 = sadd.s32 %s65, 1
    %p69 = scmp.eq.s32.totalorder %s10, 1
    %p70 = scmp.ne.s32.totalorder %s65, %s67
    %p71 = scmp.eq.s32.totalorder %s10, 0
    %p72 = por %p70, %p71
    %p73 = scmp.ne.s32.totalorder %s65, %s67
    %p74 = scmp.eq.s32.totalorder %s15, 1
    %p75 = por %p73, %p74
    %p76 = scmp.ne.s32.totalorder %s67, %s68
    %p77 = scmp.eq.s32.totalorder %s15, 0
    %p78 = por %p76, %p77
    %p79 = scmp.ne.s32.totalorder %s67, %s68
    %p80 = scmp.eq.s32.totalorder %s16, 1
    %p81 = por %p79, %p80
    %p83 = scmp.ne.s32.totalorder %s68, %s82
    %p84 = scmp.eq.s32.totalorder %s16, 0
    %p85 = por %p83, %p84
    %s87 = sadd.s32 %s86, 1
    %p90 = scmp.eq.s32.totalorder %s10, 1
    %p91 = scmp.ne.s32.totalorder %s86, %s88
    %p92 = scmp.eq.s32.totalorder %s10, 0
    %p93 = por %p91, %p92
    %p94 = scmp.ne.s32.totalorder %s86, %s88
    %p95 = scmp.eq.s32.totalorder %s15, 1
    %p96 = por %p94, %p95
    %p97 = scmp.ne.s32.totalorder %s88, %s89
    %p98 = scmp.eq.s32.totalorder %s15, 0
    %p99 = por %p97, %p98
    %p100 = scmp.ne.s32.totalorder %s88, %s89
    %p101 = scmp.eq.s32.totalorder %s16, 1
    %p102 = por %p100, %p101
    %p104 = scmp.ne.s32.totalorder %s89, %s103
    %p105 = scmp.eq.s32.totalorder %s16, 0
    %p106 = por %p104, %p105
    %s107 = ssub.s32 %s10, %s17
    %p108 = scmp.eq.s32.totalorder %s107, 0
    %s110 = sadd.s32 %s109, 1
    %s111 = scalar_select %p108, %s109, %s110
    %p114 = pneg %p108
    %p115 = scmp.eq.s32.totalorder %s10, 1
    %p116 = por %p114, %p115
    %p117 = scmp.ne.s32.totalorder %s109, %s112
    %p118 = scmp.eq.s32.totalorder %s10, 0
    %p119 = por %p117, %p118
    %p120 = scmp.ne.s32.totalorder %s109, %s112
    %p121 = scmp.eq.s32.totalorder %s15, 1
    %p122 = por %p120, %p121
    %p123 = scmp.ne.s32.totalorder %s112, %s113
    %p124 = scmp.eq.s32.totalorder %s15, 0
    %p125 = por %p123, %p124
    %p126 = scmp.ne.s32.totalorder %s112, %s113
    %p127 = scmp.eq.s32.totalorder %s16, 1
    %p128 = por %p126, %p127
    %p130 = scmp.ne.s32.totalorder %s113, %s129
    %p131 = scmp.eq.s32.totalorder %s16, 0
    %p132 = por %p130, %p131
    %p133 = scmp.le.s32.totalorder 1, %s10
    %p134 = scmp.lt.s32.totalorder %s10, 3
    %p135 = pnand %p133, %p134
    %p136 = pneg %p135
    // Predicated region
    $region9: #{residual_block.1} parent=5 // pred_check
      _
    $region10: #{residual_block.1} parent=5 // pred_check_branch
      %138 = sbr.rel (%p135) target = $region12
    $region11: #{residual_block.1} parent=5 // pred_region
      %s139 = ssub.s32 %s10, 1
      // Predicated region
      $region13: #{residual_block.1} parent=11 // pred_check
        %p140 = pneg %p57
      $region14: #{residual_block.1} parent=11 // pred_check_branch
        %142 = sbr.rel (%p140) target = $region16
      $region15: #{residual_block.1} parent=11 // pred_region
        _
      $region16: #{residual_block.1} parent=11 // pred_fallthru
        _
      // Predicated region
      $region17: #{residual_block.1} parent=11 // pred_check
        %p143 = pneg %p78
      $region18: #{residual_block.1} parent=11 // pred_check_branch
        %145 = sbr.rel (%p143) target = $region20
      $region19: #{residual_block.1} parent=11 // pred_region
        _
      $region20: #{residual_block.1} parent=11 // pred_fallthru
        _
      // Predicated region
      $region21: #{residual_block.1} parent=11 // pred_check
        %p146 = pneg %p99
      $region22: #{residual_block.1} parent=11 // pred_check_branch
        %148 = sbr.rel (%p146) target = $region24
      $region23: #{residual_block.1} parent=11 // pred_region
        _
      $region24: #{residual_block.1} parent=11 // pred_fallthru
        _
    $region12: #{residual_block.1} parent=5 // pred_fallthru
      _
    %p149 = scmp.lt.s32.totalorder %s10, 2
    // Predicated region
    $region25: #{residual_block.1} parent=5 // pred_check
      %p150 = pneg %p149
    $region26: #{residual_block.1} parent=5 // pred_check_branch
      %152 = sbr.rel (%p150) target = $region28
    $region27: #{residual_block.1} parent=5 // pred_region
      // Predicated region
      $region29: #{residual_block.1} parent=27 // pred_check
        %p153 = pneg %p30
      $region30: #{residual_block.1} parent=27 // pred_check_branch
        %155 = sbr.rel (%p153) target = $region32
      $region31: #{residual_block.1} parent=27 // pred_region
        %p156 = scmp.lt.s32.totalorder %s10, 1
        %s157 = scalar_select %p156, %s10, 1
        %s158 = smul.addr %s157, 3
        %s159 = smul.addr %s158, 8
        %s160 = scalar_lea.vmem %s0, %s159
      $region32: #{residual_block.1} parent=27 // pred_fallthru
        _
    $region28: #{residual_block.1} parent=5 // pred_fallthru
      _
    %p161 = scmp.le.s32.totalorder 1, %s10
    %p162 = scmp.lt.s32.totalorder %s10, 3
    %p163 = pnand %p161, %p162
    %p164 = pneg %p163
    // Predicated region
    $region33: #{residual_block.1} parent=5 // pred_check
      _
    $region34: #{residual_block.1} parent=5 // pred_check_branch
      %166 = sbr.rel (%p163) target = $region36
    $region35: #{residual_block.1} parent=5 // pred_region
      %s167 = ssub.s32 %s10, 1
      %p168 = scmp.lt.s32.totalorder %s15, 1
      %s169 = scalar_select %p168, %s15, 1
      %s170 = smul.addr %s169, 3
      %s171 = smul.addr %s170, 8
      %s172 = scalar_lea.vmem %s0, %s171
      %p173 = pneg %p36
      %p174 = pneg %p33
      %p175 = pneg %p57
      %p176 = pneg %p54
      %p177 = pneg %p78
      %p178 = pneg %p75
      %p179 = pneg %p99
      %p180 = pneg %p96
      %p181 = pneg %p125
      %p182 = pneg %p122
      %p183 = scmp.lt.s32.totalorder %s15, 1
      %s184 = scalar_select %p183, %s15, 1
      %s185 = smul.addr %s184, 3
      %s186 = smul.addr %s185, 8
      %s187 = scalar_lea.vmem %s4, %s186
      %p188 = scmp.lt.s32.totalorder %s15, 1
      %s189 = scalar_select %p188, %s15, 1
      %s190 = smul.addr %s189, 3
      %s191 = smul.addr %s190, 8
      %s192 = scalar_lea.vmem %s0, %s191
      %p193 = scmp.lt.s32.totalorder %s15, 1
      %s194 = scalar_select %p193, %s15, 1
      %s195 = smul.addr %s194, 3
      %s196 = smul.addr %s195, 8
      %s197 = scalar_lea.vmem %s4, %s196
      %v198 = vld [vmem:[%s3] sm:$0x7]
      %vm199 = vcmp.lt.s32.totalorder %v198, 16
      %vm200 = vcmp.eq.s32.totalorder %v198, 16
      %vm201 = vcmp.eq.s32.totalorder %v198, 17
      %v202 = vld [vmem:[%s1] sm:$0xff]
      %v203 = vld [vmem:[%s192] sm:$0xff]
      %v204 = vld [vmem:[%s192 + $0x8] sm:$0xff]
      %v205 = vld [vmem:[%s192 + $0x10] sm:$0xff]
      %209 = vrot.lane.b32.xlu0 %v203, 127
      %v210 = vpop.permute.xlu0 %209
      %211 = vrot.lane.b32.xlu0 %v204, 127
      %v212 = vpop.permute.xlu0 %211
      %213 = vrot.lane.b32.xlu0 %v205, 127
      %v214 = vpop.permute.xlu0 %213
      %vm215 = vcmask 1039360
      %v216 = vsel %vm215, %v210, %v212
      %v217 = vsel %vm215, %v212, %v214
      %221 = vrot.lane.b32.xlu0 %v203, 126
      %v222 = vpop.permute.xlu0 %221
      %223 = vrot.lane.b32.xlu0 %v204, 126
      %v224 = vpop.permute.xlu0 %223
      %225 = vrot.lane.b32.xlu0 %v205, 126
      %v226 = vpop.permute.xlu0 %225
      %vm227 = vcmask 1031168
      %v228 = vsel %vm227, %v222, %v224
      %v229 = vsel %vm227, %v224, %v226
      %233 = vrot.lane.b32.xlu0 %v203, 110
      %v234 = vpop.permute.xlu0 %233
      %235 = vrot.lane.b32.xlu0 %v204, 110
      %v236 = vpop.permute.xlu0 %235
      %237 = vrot.lane.b32.xlu0 %v205, 110
      %v238 = vpop.permute.xlu0 %237
      %vm239 = vcmask 900096
      %v240 = vsel %vm239, %v234, %v236
      %v241 = vsel %vm239, %v236, %v238
      %245 = vrot.lane.b32.xlu0 %v203, 109
      %v246 = vpop.permute.xlu0 %245
      %247 = vrot.lane.b32.xlu0 %v204, 109
      %v248 = vpop.permute.xlu0 %247
      %249 = vrot.lane.b32.xlu0 %v205, 109
      %v250 = vpop.permute.xlu0 %249
      %vm251 = vcmask 891904
      %v252 = vsel %vm251, %v246, %v248
      %v253 = vsel %vm251, %v248, %v250
      %257 = vrot.lane.b32.xlu0 %v203, 108
      %v258 = vpop.permute.xlu0 %257
      %259 = vrot.lane.b32.xlu0 %v204, 108
      %v260 = vpop.permute.xlu0 %259
      %261 = vrot.lane.b32.xlu0 %v205, 108
      %v262 = vpop.permute.xlu0 %261
      %vm263 = vcmask 883712
      %v264 = vsel %vm263, %v258, %v260
      %v265 = vsel %vm263, %v260, %v262
      %269 = vrot.lane.b32.xlu0 %v203, 92
      %v270 = vpop.permute.xlu0 %269
      %271 = vrot.lane.b32.xlu0 %v204, 92
      %v272 = vpop.permute.xlu0 %271
      %273 = vrot.lane.b32.xlu0 %v205, 92
      %v274 = vpop.permute.xlu0 %273
      %vm275 = vcmask 752640
      %v276 = vsel %vm275, %v270, %v272
      %v277 = vsel %vm275, %v272, %v274
      %281 = vrot.lane.b32.xlu0 %v203, 91
      %v282 = vpop.permute.xlu0 %281
      %283 = vrot.lane.b32.xlu0 %v204, 91
      %v284 = vpop.permute.xlu0 %283
      %285 = vrot.lane.b32.xlu0 %v205, 91
      %v286 = vpop.permute.xlu0 %285
      %vm287 = vcmask 744448
      %v288 = vsel %vm287, %v282, %v284
      %v289 = vsel %vm287, %v284, %v286
      %293 = vrot.lane.b32.xlu0 %v203, 90
      %v294 = vpop.permute.xlu0 %293
      %295 = vrot.lane.b32.xlu0 %v204, 90
      %v296 = vpop.permute.xlu0 %295
      %297 = vrot.lane.b32.xlu0 %v205, 90
      %v298 = vpop.permute.xlu0 %297
      %vm299 = vcmask 736256
      %v300 = vsel %vm299, %v294, %v296
      %v301 = vsel %vm299, %v296, %v298
      %vm305 = vcmask 588800
      %v307 = vsel %vm305, %v202, 0
      %309 = vmatprep.subr.mxu0 0.0
      %310 = vmatpush1.msra.mxu0 0.0
      %311 = vmatprep.subr.mxu0 0.0
      %312 = vmatpush1.msra.mxu0 0.0
      %313 = vmatprep.subr.mxu0 0.0
      %314 = vmatpush1.msra.mxu0 0.0
      %315 = vmatprep.subr.mxu0 0.0
      %316 = vmatpush1.msra.mxu0 0.0
      %317 = vmatprep.subr.mxu0 0.0
      %318 = vmatpush1.msra.mxu0 0.0
      %319 = vmatprep.subr.mxu0 0.0
      %320 = vmatpush1.msra.mxu0 0.0
      %321 = vmatprep.subr.mxu0 0.0
      %322 = vmatpush1.msra.mxu0 0.0
      %323 = vmatprep.subr.mxu0 %v301
      %324 = vmatpush1.msra.mxu0 %v300
      %325 = vmatprep.subr.mxu0 %v289
      %326 = vmatpush1.msra.mxu0 %v288
      %327 = vmatprep.subr.mxu0 %v277
      %328 = vmatpush1.msra.mxu0 %v276
      %329 = vmatprep.subr.mxu0 %v265
      %330 = vmatpush1.msra.mxu0 %v264
      %331 = vmatprep.subr.mxu0 %v253
      %332 = vmatpush1.msra.mxu0 %v252
      %333 = vmatprep.subr.mxu0 %v241
      %334 = vmatpush1.msra.mxu0 %v240
      %335 = vmatprep.subr.mxu0 %v229
      %336 = vmatpush1.msra.mxu0 %v228
      %337 = vmatprep.subr.mxu0 %v217
      %338 = vmatpush1.msra.mxu0 %v216
      %339 = vmatprep.subr.mxu0 %v204
      %340 = vmatpush1.msra.mxu0 %v203
      %341 = vmatprep.subr.mxu0 0.0
      %342 = vmatpush2.msra.mxu0 0.0
      %343 = vmatprep.subr.mxu0 0.0
      %344 = vmatpush2.msra.mxu0 0.0
      %345 = vmatprep.subr.mxu0 0.0
      %346 = vmatpush2.msra.mxu0 0.0
      %347 = vmatprep.subr.mxu0 0.0
      %348 = vmatpush2.msra.mxu0 0.0
      %349 = vmatprep.subr.mxu0 0.0
      %350 = vmatpush2.msra.mxu0 0.0
      %351 = vmatprep.subr.mxu0 0.0
      %352 = vmatpush2.msra.mxu0 0.0
      %353 = vmatprep.subr.mxu0 0.0
      %354 = vmatpush2.msra.mxu0 0.0
      %355 = vmatprep.subr.mxu0 0.0
      %356 = vmatpush2.msra.mxu0 0.0
      %357 = vmatprep.subr.mxu0 0.0
      %358 = vmatpush2.msra.mxu0 0.0
      %359 = vmatprep.subr.mxu0 0.0
      %360 = vmatpush2.msra.mxu0 0.0
      %361 = vmatprep.subr.mxu0 0.0
      %362 = vmatpush2.msra.mxu0 0.0
      %363 = vmatprep.subr.mxu0 0.0
      %364 = vmatpush2.msra.mxu0 0.0
      %365 = vmatprep.subr.mxu0 0.0
      %366 = vmatpush2.msra.mxu0 0.0
      %367 = vmatprep.subr.mxu0 0.0
      %368 = vmatpush2.msra.mxu0 0.0
      %369 = vmatprep.subr.mxu0 0.0
      %370 = vmatpush2.msra.mxu0 0.0
      %371 = vmatprep.subr.mxu0 0.0
      %372 = vmatpush2.msra.mxu0 0.0
      %373 = vmatprep.mubr.f32.mxu0 0.0
      %374 = vmatmul.mubr.f32.gmra.mxu0 %v307
      %v375 = vpop.f32.mrf.mxu0
      %v376 = vadd.f32 0.0, %v375
      %v377 = vpop.f32.mrf.mxu0
      %v378 = vadd.f32 0.0, %v377
      %379 = vdwg.mxu0
      %380 = vmatprep.subr.mxu0 0.0
      %381 = vmatpush1.msra.mxu0 0.0
      %382 = vmatprep.subr.mxu0 0.0
      %383 = vmatpush1.msra.mxu0 0.0
      %384 = vmatprep.subr.mxu0 0.0
      %385 = vmatpush1.msra.mxu0 0.0
      %386 = vmatprep.subr.mxu0 0.0
      %387 = vmatpush1.msra.mxu0 0.0
      %388 = vmatprep.subr.mxu0 0.0
      %389 = vmatpush1.msra.mxu0 0.0
      %390 = vmatprep.subr.mxu0 0.0
      %391 = vmatpush1.msra.mxu0 0.0
      %392 = vmatprep.subr.mxu0 0.0
      %393 = vmatpush1.msra.mxu0 0.0
      %394 = vmatprep.subr.mxu0 0.0
      %395 = vmatpush1.msra.mxu0 %v298
      %396 = vmatprep.subr.mxu0 0.0
      %397 = vmatpush1.msra.mxu0 %v286
      %398 = vmatprep.subr.mxu0 0.0
      %399 = vmatpush1.msra.mxu0 %v274
      %400 = vmatprep.subr.mxu0 0.0
      %401 = vmatpush1.msra.mxu0 %v262
      %402 = vmatprep.subr.mxu0 0.0
      %403 = vmatpush1.msra.mxu0 %v250
      %404 = vmatprep.subr.mxu0 0.0
      %405 = vmatpush1.msra.mxu0 %v238
      %406 = vmatprep.subr.mxu0 0.0
      %407 = vmatpush1.msra.mxu0 %v226
      %408 = vmatprep.subr.mxu0 0.0
      %409 = vmatpush1.msra.mxu0 %v214
      %410 = vmatprep.subr.mxu0 0.0
      %411 = vmatpush1.msra.mxu0 %v205
      %412 = vmatprep.subr.mxu0 0.0
      %413 = vmatpush2.msra.mxu0 0.0
      %414 = vmatprep.subr.mxu0 0.0
      %415 = vmatpush2.msra.mxu0 0.0
      %416 = vmatprep.subr.mxu0 0.0
      %417 = vmatpush2.msra.mxu0 0.0
      %418 = vmatprep.subr.mxu0 0.0
      %419 = vmatpush2.msra.mxu0 0.0
      %420 = vmatprep.subr.mxu0 0.0
      %421 = vmatpush2.msra.mxu0 0.0
      %422 = vmatprep.subr.mxu0 0.0
      %423 = vmatpush2.msra.mxu0 0.0
      %424 = vmatprep.subr.mxu0 0.0
      %425 = vmatpush2.msra.mxu0 0.0
      %426 = vmatprep.subr.mxu0 0.0
      %427 = vmatpush2.msra.mxu0 0.0
      %428 = vmatprep.subr.mxu0 0.0
      %429 = vmatpush2.msra.mxu0 0.0
      %430 = vmatprep.subr.mxu0 0.0
      %431 = vmatpush2.msra.mxu0 0.0
      %432 = vmatprep.subr.mxu0 0.0
      %433 = vmatpush2.msra.mxu0 0.0
      %434 = vmatprep.subr.mxu0 0.0
      %435 = vmatpush2.msra.mxu0 0.0
      %436 = vmatprep.subr.mxu0 0.0
      %437 = vmatpush2.msra.mxu0 0.0
      %438 = vmatprep.subr.mxu0 0.0
      %439 = vmatpush2.msra.mxu0 0.0
      %440 = vmatprep.subr.mxu0 0.0
      %441 = vmatpush2.msra.mxu0 0.0
      %442 = vmatprep.subr.mxu0 0.0
      %443 = vmatpush2.msra.mxu0 0.0
      %444 = vmatprep.mubr.f32.mxu0 0.0
      %445 = vmatmul.mubr.f32.gmra.mxu0 %v307
      %v446 = vpop.f32.mrf.mxu0
      %v447 = vadd.f32 0.0, %v446
      %v448 = vpop.f32.mrf.mxu0
      %449 = vdwg.mxu0
      %v450 = vsel %vm199, 1, 0
      %v451 = vlaneseq
      %v452 = vshrl.u32 %v451, 7
      %v453 = vsub.s32 0, %v452
      %v454 = vrot.slane %v450, %v453
      %v455 = vlaneseq
      %v456 = vshrl.u32 %v455, 7
      %v457 = vsub.s32 1, %v456
      %v458 = vrot.slane %v450, %v457
      %v459 = vlaneseq
      %v460 = vshrl.u32 %v459, 7
      %v461 = vsub.s32 2, %v460
      %v462 = vrot.slane %v450, %v461
      %vm463 = vcmp.eq.s32.totalorder %v454, 1
      %vm464 = vcmp.eq.s32.totalorder %v458, 1
      %vm465 = vcmp.eq.s32.totalorder %v462, 1
      %v466 = vsel %vm463, %v376, 0.0
      %v467 = vsel %vm464, %v378, 0.0
      %v468 = vsel %vm465, %v447, 0.0
      %v469 = vadd.f32 %v466, %v467
      %vm470 = vcmask 261120
      %v471 = vsel %vm470, %v468, 0.0
      %v472 = vadd.f32 %v469, %v471
      %473 = vadd.xlane.f32.xlu0 %v472
      %v474 = vpop.xlane.xlu0 %473
      %v475 = vmul.f32 %v466, %v466
      %v476 = vmul.f32 %v467, %v467
      %v477 = vmul.f32 %v468, %v468
      %v478 = vadd.f32 %v475, %v476
      %v479 = vsel %vm470, %v477, 0.0
      %v480 = vadd.f32 %v478, %v479
      %481 = vadd.xlane.f32.xlu0 %v480
      %v482 = vpop.xlane.xlu0 %481
      %v483 = vmul.f32 %v474, 0.00390625
      %v484 = vmul.f32 %v482, 0.00390625
      %v485 = vmul.f32 %v483, %v483
      %v486 = vsub.f32 %v484, %v485
      %v487 = vsub.f32 %v376, %v483
      %v488 = vsub.f32 %v378, %v483
      %v489 = vsub.f32 %v447, %v483
      %v490 = vadd.f32 %v486, 1e-05
      %v491 = vrsqrt.pop %v490
      %v492 = vmul.f32 %v487, %v491
      %v493 = vmul.f32 %v488, %v491
      %v494 = vmul.f32 %v489, %v491
      %v495 = vmax.f32 %v492, 0.0
      %v496 = vmax.f32 %v493, 0.0
      %v497 = vmax.f32 %v494, 0.0
      %499 = vrot.lane.b32.xlu0 %v497, 98
      %v500 = vpop.permute.xlu0 %499
      %504 = vrot.lane.b32.xlu0 %v495, 2
      %v505 = vpop.permute.xlu0 %504
      %506 = vrot.lane.b32.xlu0 %v496, 2
      %v507 = vpop.permute.xlu0 %506
      %508 = vrot.lane.b32.xlu0 %v497, 2
      %v509 = vpop.permute.xlu0 %508
      %vm510 = vcmask 15360
      %v511 = vsel %vm510, %v505, %v507
      %v512 = vsel %vm510, %v507, %v509
      %v516 = vsel %vm510, %v500, %v505
      %517 = vrot.lane.b32.xlu0 %v495, 126
      %v518 = vpop.permute.xlu0 %517
      %519 = vrot.lane.b32.xlu0 %v496, 126
      %v520 = vpop.permute.xlu0 %519
      %521 = vrot.lane.b32.xlu0 %v497, 126
      %v522 = vpop.permute.xlu0 %521
      %v523 = vsel %vm227, %v518, %v520
      %v524 = vsel %vm227, %v520, %v522
      %528 = vrot.lane.b32.xlu0 %v495, 30
      %v529 = vpop.permute.xlu0 %528
      %vm531 = vcmask 244736
      %v532 = vsel %vm531, %v522, %v529
      %v533 = vsel %vm201, 1, 0
      %v534 = vlaneseq
      %v535 = vshrl.u32 %v534, 7
      %v536 = vsub.s32 0, %v535
      %v537 = vrot.slane %v533, %v536
      %v538 = vlaneseq
      %v539 = vshrl.u32 %v538, 7
      %v540 = vsub.s32 1, %v539
      %v541 = vrot.slane %v533, %v540
      %v542 = vlaneseq
      %v543 = vshrl.u32 %v542, 7
      %v544 = vsub.s32 2, %v543
      %v545 = vrot.slane %v533, %v544
      %vm546 = vcmp.eq.s32.totalorder %v537, 1
      %vm547 = vcmp.eq.s32.totalorder %v541, 1
      %vm548 = vcmp.eq.s32.totalorder %v545, 1
      %v549 = vsel %vm546, %v523, %v495
      %v550 = vsel %vm547, %v524, %v496
      %v551 = vsel %vm548, %v532, %v497
      %v552 = vsel %vm200, 1, 0
      %v553 = vlaneseq
      %v554 = vshrl.u32 %v553, 7
      %v555 = vsub.s32 0, %v554
      %v556 = vrot.slane %v552, %v555
      %v557 = vlaneseq
      %v558 = vshrl.u32 %v557, 7
      %v559 = vsub.s32 1, %v558
      %v560 = vrot.slane %v552, %v559
      %v561 = vlaneseq
      %v562 = vshrl.u32 %v561, 7
      %v563 = vsub.s32 2, %v562
      %v564 = vrot.slane %v552, %v563
      %vm565 = vcmp.eq.s32.totalorder %v556, 1
      %vm566 = vcmp.eq.s32.totalorder %v560, 1
      %vm567 = vcmp.eq.s32.totalorder %v564, 1
      %v568 = vsel %vm565, %v516, %v549
      %v569 = vsel %vm566, %v511, %v550
      %v570 = vsel %vm567, %v512, %v551
      %574 = vrot.lane.b32.xlu0 %v568, 19
      %v575 = vpop.permute.xlu0 %574
      %576 = vrot.lane.b32.xlu0 %v569, 19
      %v577 = vpop.permute.xlu0 %576
      %578 = vrot.lane.b32.xlu0 %v570, 19
      %v579 = vpop.permute.xlu0 %578
      %vm580 = vcmask 154624
      %v581 = vsel %vm580, %v575, %v577
      %v582 = vsel %vm580, %v577, %v579
      %vm586 = vcmask 1047704
      %587 = vst.msk [vmem:[#allocation2] sm:$0xff] %vm586, %v575
      %588 = vst [vmem:[#allocation2 + $0x8] sm:$0xff] %v581
      %vm589 = vcmask 416768
      %590 = vst.msk [vmem:[#allocation2 + $0x10] sm:$0xff] %vm589, %v582
      %v591 = vld [vmem:[#allocation2] sm:$0xff]
      %593 = vrot.lane.b32.xlu0 %v591, 126
      %v594 = vpop.permute.xlu0 %593
      %vm596 = vcmask 154768
      %597 = vst.msk [vmem:[#allocation2] sm:$0xff] %vm596, %v594
      %v598 = vld [vmem:[#allocation2] sm:$0xff]
      %600 = vrot.lane.b32.xlu0 %v598, 92
      %v601 = vpop.permute.xlu0 %600
      %vm603 = vcmask 146432
      %604 = vst.msk [vmem:[#allocation2] sm:$0xff] %vm603, %v601
      %v605 = vld [vmem:[#allocation2 + $0x10] sm:$0xff]
      %607 = vrot.lane.b32.xlu0 %v605, 36
      %v608 = vpop.permute.xlu0 %607
      %vm610 = vcmask 556432
      %611 = vst.msk [vmem:[#allocation2 + $0x10] sm:$0xff] %vm610, %v608
      %vm612 = vcmask 572960
      %613 = vst.msk [vmem:[#allocation2 + $0x10] sm:$0xff] %vm612, 0.0
      %v614 = vld [vmem:[%s2] sm:$0xff]
      %v615 = vld [vmem:[#allocation2] sm:$0xff]
      %v616 = vld [vmem:[#allocation2 + $0x8] sm:$0xff]
      %v617 = vld [vmem:[#allocation2 + $0x10] sm:$0xff]
      %621 = vrot.lane.b32.xlu0 %v615, 127
      %v622 = vpop.permute.xlu0 %621
      %623 = vrot.lane.b32.xlu0 %v616, 127
      %v624 = vpop.permute.xlu0 %623
      %625 = vrot.lane.b32.xlu0 %v617, 127
      %v626 = vpop.permute.xlu0 %625
      %v627 = vsel %vm215, %v622, %v624
      %v628 = vsel %vm215, %v624, %v626
      %632 = vrot.lane.b32.xlu0 %v615, 126
      %v633 = vpop.permute.xlu0 %632
      %634 = vrot.lane.b32.xlu0 %v616, 126
      %v635 = vpop.permute.xlu0 %634
      %636 = vrot.lane.b32.xlu0 %v617, 126
      %v637 = vpop.permute.xlu0 %636
      %v638 = vsel %vm227, %v633, %v635
      %v639 = vsel %vm227, %v635, %v637
      %643 = vrot.lane.b32.xlu0 %v615, 110
      %v644 = vpop.permute.xlu0 %643
      %645 = vrot.lane.b32.xlu0 %v616, 110
      %v646 = vpop.permute.xlu0 %645
      %647 = vrot.lane.b32.xlu0 %v617, 110
      %v648 = vpop.permute.xlu0 %647
      %v649 = vsel %vm239, %v644, %v646
      %v650 = vsel %vm239, %v646, %v648
      %654 = vrot.lane.b32.xlu0 %v615, 109
      %v655 = vpop.permute.xlu0 %654
      %656 = vrot.lane.b32.xlu0 %v616, 109
      %v657 = vpop.permute.xlu0 %656
      %658 = vrot.lane.b32.xlu0 %v617, 109
      %v659 = vpop.permute.xlu0 %658
      %v660 = vsel %vm251, %v655, %v657
      %v661 = vsel %vm251, %v657, %v659
      %665 = vrot.lane.b32.xlu0 %v615, 108
      %v666 = vpop.permute.xlu0 %665
      %667 = vrot.lane.b32.xlu0 %v616, 108
      %v668 = vpop.permute.xlu0 %667
      %669 = vrot.lane.b32.xlu0 %v617, 108
      %v670 = vpop.permute.xlu0 %669
      %v671 = vsel %vm263, %v666, %v668
      %v672 = vsel %vm263, %v668, %v670
      %676 = vrot.lane.b32.xlu0 %v615, 92
      %v677 = vpop.permute.xlu0 %676
      %678 = vrot.lane.b32.xlu0 %v616, 92
      %v679 = vpop.permute.xlu0 %678
      %680 = vrot.lane.b32.xlu0 %v617, 92
      %v681 = vpop.permute.xlu0 %680
      %v682 = vsel %vm275, %v677, %v679
      %v683 = vsel %vm275, %v679, %v681
      %687 = vrot.lane.b32.xlu0 %v615, 91
      %v688 = vpop.permute.xlu0 %687
      %689 = vrot.lane.b32.xlu0 %v616, 91
      %v690 = vpop.permute.xlu0 %689
      %691 = vrot.lane.b32.xlu0 %v617, 91
      %v692 = vpop.permute.xlu0 %691
      %v693 = vsel %vm287, %v688, %v690
      %v694 = vsel %vm287, %v690, %v692
      %698 = vrot.lane.b32.xlu0 %v615, 90
      %v699 = vpop.permute.xlu0 %698
      %700 = vrot.lane.b32.xlu0 %v616, 90
      %v701 = vpop.permute.xlu0 %700
      %702 = vrot.lane.b32.xlu0 %v617, 90
      %v703 = vpop.permute.xlu0 %702
      %v704 = vsel %vm299, %v699, %v701
      %v705 = vsel %vm299, %v701, %v703
      %v710 = vsel %vm305, %v614, 0
      %712 = vmatprep.subr.mxu0 0.0
      %713 = vmatpush1.msra.mxu0 0.0
      %714 = vmatprep.subr.mxu0 0.0
      %715 = vmatpush1.msra.mxu0 0.0
      %716 = vmatprep.subr.mxu0 0.0
      %717 = vmatpush1.msra.mxu0 0.0
      %718 = vmatprep.subr.mxu0 0.0
      %719 = vmatpush1.msra.mxu0 0.0
      %720 = vmatprep.subr.mxu0 0.0
      %721 = vmatpush1.msra.mxu0 0.0
      %722 = vmatprep.subr.mxu0 0.0
      %723 = vmatpush1.msra.mxu0 0.0
      %724 = vmatprep.subr.mxu0 0.0
      %725 = vmatpush1.msra.mxu0 0.0
      %726 = vmatprep.subr.mxu0 %v705
      %727 = vmatpush1.msra.mxu0 %v704
      %728 = vmatprep.subr.mxu0 %v694
      %729 = vmatpush1.msra.mxu0 %v693
      %730 = vmatprep.subr.mxu0 %v683
      %731 = vmatpush1.msra.mxu0 %v682
      %732 = vmatprep.subr.mxu0 %v672
      %733 = vmatpush1.msra.mxu0 %v671
      %734 = vmatprep.subr.mxu0 %v661
      %735 = vmatpush1.msra.mxu0 %v660
      %736 = vmatprep.subr.mxu0 %v650
      %737 = vmatpush1.msra.mxu0 %v649
      %738 = vmatprep.subr.mxu0 %v639
      %739 = vmatpush1.msra.mxu0 %v638
      %740 = vmatprep.subr.mxu0 %v628
      %741 = vmatpush1.msra.mxu0 %v627
      %742 = vmatprep.subr.mxu0 %v616
      %743 = vmatpush1.msra.mxu0 %v615
      %744 = vmatprep.subr.mxu0 0.0
      %745 = vmatpush2.msra.mxu0 0.0
      %746 = vmatprep.subr.mxu0 0.0
      %747 = vmatpush2.msra.mxu0 0.0
      %748 = vmatprep.subr.mxu0 0.0
      %749 = vmatpush2.msra.mxu0 0.0
      %750 = vmatprep.subr.mxu0 0.0
      %751 = vmatpush2.msra.mxu0 0.0
      %752 = vmatprep.subr.mxu0 0.0
      %753 = vmatpush2.msra.mxu0 0.0
      %754 = vmatprep.subr.mxu0 0.0
      %755 = vmatpush2.msra.mxu0 0.0
      %756 = vmatprep.subr.mxu0 0.0
      %757 = vmatpush2.msra.mxu0 0.0
      %758 = vmatprep.subr.mxu0 0.0
      %759 = vmatpush2.msra.mxu0 0.0
      %760 = vmatprep.subr.mxu0 0.0
      %761 = vmatpush2.msra.mxu0 0.0
      %762 = vmatprep.subr.mxu0 0.0
      %763 = vmatpush2.msra.mxu0 0.0
      %764 = vmatprep.subr.mxu0 0.0
      %765 = vmatpush2.msra.mxu0 0.0
      %766 = vmatprep.subr.mxu0 0.0
      %767 = vmatpush2.msra.mxu0 0.0
      %768 = vmatprep.subr.mxu0 0.0
      %769 = vmatpush2.msra.mxu0 0.0
      %770 = vmatprep.subr.mxu0 0.0
      %771 = vmatpush2.msra.mxu0 0.0
      %772 = vmatprep.subr.mxu0 0.0
      %773 = vmatpush2.msra.mxu0 0.0
      %774 = vmatprep.subr.mxu0 0.0
      %775 = vmatpush2.msra.mxu0 0.0
      %776 = vmatprep.mubr.f32.mxu0 0.0
      %777 = vmatmul.mubr.f32.gmra.mxu0 %v710
      %v778 = vpop.f32.mrf.mxu0
      %v779 = vadd.f32 0.0, %v778
      %v780 = vpop.f32.mrf.mxu0
      %v781 = vadd.f32 0.0, %v780
      %782 = vdwg.mxu0
      %783 = vmatprep.subr.mxu0 0.0
      %784 = vmatpush1.msra.mxu0 0.0
      %785 = vmatprep.subr.mxu0 0.0
      %786 = vmatpush1.msra.mxu0 0.0
      %787 = vmatprep.subr.mxu0 0.0
      %788 = vmatpush1.msra.mxu0 0.0
      %789 = vmatprep.subr.mxu0 0.0
      %790 = vmatpush1.msra.mxu0 0.0
      %791 = vmatprep.subr.mxu0 0.0
      %792 = vmatpush1.msra.mxu0 0.0
      %793 = vmatprep.subr.mxu0 0.0
      %794 = vmatpush1.msra.mxu0 0.0
      %795 = vmatprep.subr.mxu0 0.0
      %796 = vmatpush1.msra.mxu0 0.0
      %797 = vmatprep.subr.mxu0 0.0
      %798 = vmatpush1.msra.mxu0 %v703
      %799 = vmatprep.subr.mxu0 0.0
      %800 = vmatpush1.msra.mxu0 %v692
      %801 = vmatprep.subr.mxu0 0.0
      %802 = vmatpush1.msra.mxu0 %v681
      %803 = vmatprep.subr.mxu0 0.0
      %804 = vmatpush1.msra.mxu0 %v670
      %805 = vmatprep.subr.mxu0 0.0
      %806 = vmatpush1.msra.mxu0 %v659
      %807 = vmatprep.subr.mxu0 0.0
      %808 = vmatpush1.msra.mxu0 %v648
      %809 = vmatprep.subr.mxu0 0.0
      %810 = vmatpush1.msra.mxu0 %v637
      %811 = vmatprep.subr.mxu0 0.0
      %812 = vmatpush1.msra.mxu0 %v626
      %813 = vmatprep.subr.mxu0 0.0
      %814 = vmatpush1.msra.mxu0 %v617
      %815 = vmatprep.subr.mxu0 0.0
      %816 = vmatpush2.msra.mxu0 0.0
      %817 = vmatprep.subr.mxu0 0.0
      %818 = vmatpush2.msra.mxu0 0.0
      %819 = vmatprep.subr.mxu0 0.0
      %820 = vmatpush2.msra.mxu0 0.0
      %821 = vmatprep.subr.mxu0 0.0
      %822 = vmatpush2.msra.mxu0 0.0
      %823 = vmatprep.subr.mxu0 0.0
      %824 = vmatpush2.msra.mxu0 0.0
      %825 = vmatprep.subr.mxu0 0.0
      %826 = vmatpush2.msra.mxu0 0.0
      %827 = vmatprep.subr.mxu0 0.0
      %828 = vmatpush2.msra.mxu0 0.0
      %829 = vmatprep.subr.mxu0 0.0
      %830 = vmatpush2.msra.mxu0 0.0
      %831 = vmatprep.subr.mxu0 0.0
      %832 = vmatpush2.msra.mxu0 0.0
      %833 = vmatprep.subr.mxu0 0.0
      %834 = vmatpush2.msra.mxu0 0.0
      %835 = vmatprep.subr.mxu0 0.0
      %836 = vmatpush2.msra.mxu0 0.0
      %837 = vmatprep.subr.mxu0 0.0
      %838 = vmatpush2.msra.mxu0 0.0
      %839 = vmatprep.subr.mxu0 0.0
      %840 = vmatpush2.msra.mxu0 0.0
      %841 = vmatprep.subr.mxu0 0.0
      %842 = vmatpush2.msra.mxu0 0.0
      %843 = vmatprep.subr.mxu0 0.0
      %844 = vmatpush2.msra.mxu0 0.0
      %845 = vmatprep.subr.mxu0 0.0
      %846 = vmatpush2.msra.mxu0 0.0
      %847 = vmatprep.mubr.f32.mxu0 0.0
      %848 = vmatmul.mubr.f32.gmra.mxu0 %v710
      %v849 = vpop.f32.mrf.mxu0
      %v850 = vadd.f32 0.0, %v849
      %v851 = vpop.f32.mrf.mxu0
      %852 = vdwg.mxu0
      %v853 = vsel %vm463, %v779, 0.0
      %v854 = vsel %vm464, %v781, 0.0
      %v855 = vsel %vm465, %v850, 0.0
      %v856 = vadd.f32 %v853, %v854
      %v857 = vsel %vm470, %v855, 0.0
      %v858 = vadd.f32 %v856, %v857
      %859 = vadd.xlane.f32.xlu0 %v858
      %v860 = vpop.xlane.xlu0 %859
      %v861 = vmul.f32 %v853, %v853
      %v862 = vmul.f32 %v854, %v854
      %v863 = vmul.f32 %v855, %v855
      %v864 = vadd.f32 %v861, %v862
      %v865 = vsel %vm470, %v863, 0.0
      %v866 = vadd.f32 %v864, %v865
      %867 = vadd.xlane.f32.xlu0 %v866
      %v868 = vpop.xlane.xlu0 %867
      %v869 = vmul.f32 %v860, 0.00390625
      %v870 = vmul.f32 %v868, 0.00390625
      %v871 = vmul.f32 %v869, %v869
      %v872 = vsub.f32 %v870, %v871
      %v873 = vsub.f32 %v779, %v869
      %v874 = vsub.f32 %v781, %v869
      %v875 = vsub.f32 %v850, %v869
      %v876 = vadd.f32 %v872, 1e-05
      %v877 = vrsqrt.pop %v876
      %v878 = vmul.f32 %v873, %v877
      %v879 = vmul.f32 %v874, %v877
      %v880 = vmul.f32 %v875, %v877
      %v881 = vld [vmem:[%s192] sm:$0xff]
      %v882 = vld [vmem:[%s192 + $0x8] sm:$0xff]
      %v883 = vld [vmem:[%s192 + $0x10] sm:$0xff]
      %887 = vrot.lane.b32.xlu0 %v878, 19
      %v888 = vpop.permute.xlu0 %887
      %889 = vrot.lane.b32.xlu0 %v879, 19
      %v890 = vpop.permute.xlu0 %889
      %891 = vrot.lane.b32.xlu0 %v880, 19
      %v892 = vpop.permute.xlu0 %891
      %v893 = vsel %vm580, %v888, %v890
      %v894 = vsel %vm580, %v890, %v892
      %v898 = vadd.f32 %v881, %v888
      %v899 = vadd.f32 %v882, %v893
      %v900 = vadd.f32 %v883, %v894
      %904 = vrot.lane.b32.xlu0 %v898, 109
      %v905 = vpop.permute.xlu0 %904
      %906 = vrot.lane.b32.xlu0 %v899, 109
      %v907 = vpop.permute.xlu0 %906
      %908 = vrot.lane.b32.xlu0 %v900, 109
      %v909 = vpop.permute.xlu0 %908
      %v910 = vsel %vm251, %v905, %v907
      %v911 = vsel %vm251, %v907, %v909
      %915 = vst [vmem:[%s197] sm:$0xff] %v910
      %916 = vst [vmem:[%s197 + $0x8] sm:$0xff] %v911
      %917 = vst.msk [vmem:[%s197 + $0x10] sm:$0xff] %vm470, %v909
      %p918 = scmp.lt.s32.totalorder %s15, 1
      %s919 = scalar_select %p918, %s15, 1
      %s920 = smul.addr %s919, 3
      %s921 = smul.addr %s920, 8
      %s922 = scalar_lea.vmem %s4, %s921
      // Predicated region
      $region37: #{residual_block.1} parent=35 // pred_check
        %p923 = pneg %p122
      $region38: #{residual_block.1} parent=35 // pred_check_branch
        %925 = sbr.rel (%p923) target = $region40
      $region39: #{residual_block.1} parent=35 // pred_region
        _
      $region40: #{residual_block.1} parent=35 // pred_fallthru
        _
    $region36: #{residual_block.1} parent=5 // pred_fallthru
      _
    %p926 = scmp.le.s32.totalorder 2, %s10
    // Predicated region
    $region41: #{residual_block.1} parent=5 // pred_check
      %p927 = pneg %p926
    $region42: #{residual_block.1} parent=5 // pred_check_branch
      %929 = sbr.rel (%p927) target = $region44
    $region43: #{residual_block.1} parent=5 // pred_region
      %s930 = ssub.s32 %s10, 2
      // Predicated region
      $region45: #{residual_block.1} parent=43 // pred_check
        %p931 = pneg %p128
      $region46: #{residual_block.1} parent=43 // pred_check_branch
        %933 = sbr.rel (%p931) target = $region48
      $region47: #{residual_block.1} parent=43 // pred_region
        %p934 = scmp.lt.s32.totalorder %s16, 1
        %s935 = scalar_select %p934, %s16, 1
        %s936 = smul.addr %s935, 3
        %s937 = smul.addr %s936, 8
        %s938 = scalar_lea.vmem %s4, %s937
      $region48: #{residual_block.1} parent=43 // pred_fallthru
        _
    $region44: #{residual_block.1} parent=5 // pred_fallthru
      _
  $region6: #{residual_block.1} parent=0 // loop_footer
    %s14 = sadd.s32 1, %s10
  $region7: #{residual_block.1} parent=0 // loop_footer_branch
    %9 = sbr.rel target = $region3
  $region8: #{residual_block.1} parent=0 // loop_exit
    _

</llo_original>
